<compile_context>
chip_gen: v6e
topology: v6e:2x2x1
jax: 0.10.0
libtpu: 0.0.40
codegen_flags: <defaults>
</compile_context>

<pallas_src>
import functools

import jax
import jax.numpy as jnp
from jax.experimental import pallas as pl
from jax.experimental.pallas import tpu as pltpu


def _round_up(x, m):
    return ((x + m - 1) // m) * m


def _vnet_kernel(x_ref, w1_ref, b1_ref, w2_ref, b2_ref, w3_ref, b3_ref, o_ref):
    # x: (S, Bt) -- batch on lanes, so everything below is lane-dense.
    x = x_ref[...]
    h1 = jnp.dot(w1_ref[...], x, preferred_element_type=jnp.float32) + b1_ref[...]
    h1 = jnp.maximum(h1, 0.0)                                   # (Hp, Bt)
    h2 = jnp.dot(w2_ref[...], h1, preferred_element_type=jnp.float32) + b2_ref[...]
    h2 = jnp.maximum(h2, 0.0)                                   # (Hp, Bt)
    # Final H->1 head off the MXU: lane-broadcast multiply + sublane reduce.
    out = jnp.sum(w3_ref[...] * h2, axis=0, keepdims=True) + b3_ref[0, 0]
    o_ref[...] = out.astype(o_ref.dtype)                        # (1, Bt)


def prepare_params(params, lane=128):
    """Convert PyTorch-layout params to the padded kernel layout (done once).

    PyTorch layout in:  w1 (H,S), b1 (H,), w2 (H,H), b2 (H,), w3 (1,H), b3 (1,)
    Kernel layout out:  w1 (Hp,S), b1 (Hp,1), w2 (Hp,Hp), b2 (Hp,1),
                        w3 (Hp,1), b3 (1,1)   with Hp = round_up(H, 128)
    """
    w1, b1 = params["w1"], params["b1"]
    w2, b2 = params["w2"], params["b2"]
    w3, b3 = params["w3"], params["b3"]
    H, S = w1.shape
    Hp = _round_up(H, lane)
    return {
        "w1": jnp.zeros((Hp, S), jnp.float32).at[:H, :].set(w1),
        "b1": jnp.zeros((Hp, 1), jnp.float32).at[:H, 0].set(b1),
        "w2": jnp.zeros((Hp, Hp), jnp.float32).at[:H, :H].set(w2),
        "b2": jnp.zeros((Hp, 1), jnp.float32).at[:H, 0].set(b2),
        "w3": jnp.zeros((Hp, 1), jnp.float32).at[:H, 0].set(w3[0]),
        "b3": b3.reshape(1, 1).astype(jnp.float32),
    }


@functools.partial(jax.jit, static_argnames=("block_b",))
def v_network_forward(state, kp, block_b=512):
    """Fused VNetwork forward.  state: (B, state_dim) f32 -> (B, 1) f32."""
    B, S = state.shape
    Hp = kp["w2"].shape[0]

    # Batch tile: multiple of 128 lanes, capped at block_b, bounded VMEM.
    bB = min(block_b, max(128, _round_up(B, 128)))
    B_pad = _round_up(B, bB)
    nb = B_pad // bB

    # Layout plumbing: put batch on the lane (last) axis, zero-pad to tiles.
    x = jnp.zeros((S, B_pad), jnp.float32).at[:, :B].set(state.T.astype(jnp.float32))

    out = pl.pallas_call(
        _vnet_kernel,
        out_shape=jax.ShapeDtypeStruct((1, B_pad), jnp.float32),
        grid=(nb,),
        in_specs=[
            pl.BlockSpec((S, bB), lambda i: (0, i)),        # state tile (streams)
            pl.BlockSpec((Hp, S), lambda i: (0, 0)),        # w1   (resident)
            pl.BlockSpec((Hp, 1), lambda i: (0, 0)),        # b1   (resident)
            pl.BlockSpec((Hp, Hp), lambda i: (0, 0)),       # w2   (resident)
            pl.BlockSpec((Hp, 1), lambda i: (0, 0)),        # b2   (resident)
            pl.BlockSpec((Hp, 1), lambda i: (0, 0)),        # w3   (resident)
            pl.BlockSpec(memory_space=pltpu.MemorySpace.SMEM),  # b3 scalar
        ],
        out_specs=pl.BlockSpec((1, bB), lambda i: (0, i)),  # lane-dense output
        compiler_params=pltpu.CompilerParams(
            dimension_semantics=("parallel",),              # megacore on v7x
            vmem_limit_bytes=32 * 1024 * 1024,              # safe on v5e/v6e/v7x
        ),
    )(x, kp["w1"], kp["b1"], kp["w2"], kp["b2"], kp["w3"], kp["b3"])

    return out[0, :B].reshape(B, 1)


def init_params(key, state_dim, hidden_dim):
    """Xavier-uniform weights (matching weights_init_) + zero biases,
    in PyTorch nn.Linear layout: weight (out, in), bias (out,)."""
    def xavier(k, fan_out, fan_in):
        limit = jnp.sqrt(6.0 / (fan_in + fan_out))
        return jax.random.uniform(k, (fan_out, fan_in), jnp.float32, -limit, limit)

    k1, k2, k3 = jax.random.split(key, 3)
    return {
        "w1": xavier(k1, hidden_dim, state_dim),
        "b1": jnp.zeros((hidden_dim,), jnp.float32),
        "w2": xavier(k2, hidden_dim, hidden_dim),
        "b2": jnp.zeros((hidden_dim,), jnp.float32),
        "w3": xavier(k3, 1, hidden_dim),
        "b3": jnp.zeros((1,), jnp.float32),
    }


# TODO(synk): clone / psi / set_psi / exp_avg are parameter-management helpers,
# not part of the forward pass; they have no kernel equivalent here.


if __name__ == "__main__":
    key = jax.random.PRNGKey(0)
    k_state, k_params, k_big = jax.random.split(key, 3)

    batch = 2
    state_dim = 4      # env.observation_space.shape[0]
    hidden_dim = 32

    state = jax.random.normal(k_state, (batch, state_dim), jnp.float32)
    params = init_params(k_params, state_dim, hidden_dim)
    kparams = prepare_params(params)

    def ref_forward(s):
        h1 = jnp.maximum(s @ params["w1"].T + params["b1"], 0.0)
        h2 = jnp.maximum(h1 @ params["w2"].T + params["b2"], 0.0)
        return h2 @ params["w3"].T + params["b3"]

    # Small acting-path case.
    out = jax.block_until_ready(v_network_forward(state, kparams))
    assert out.shape == (batch, 1)
    assert jnp.allclose(out, ref_forward(state), atol=1e-4), "mismatch vs reference (B=2)"

    # Exercise the tiled / pipelined multi-block path (grid > 1).
    big_state = jax.random.normal(k_big, (384, state_dim), jnp.float32)
    out_big = jax.block_until_ready(v_network_forward(big_state, kparams, block_b=128))
    assert out_big.shape == (384, 1)
    assert jnp.allclose(out_big, ref_forward(big_state), atol=1e-4), "mismatch vs reference (B=384)"

    print("KERNEL_OK")
</pallas_src>

<mosaic_0001>
module attributes {stable_mosaic.version = 11 : i64} {
  func.func @_vnet_kernel(%arg0: i32, %arg1: memref<4x128xf32, #tpu.memory_space<vmem>>, %arg2: memref<128x4xf32, #tpu.memory_space<vmem>>, %arg3: memref<128x1xf32, #tpu.memory_space<vmem>>, %arg4: memref<128x128xf32, #tpu.memory_space<vmem>>, %arg5: memref<128x1xf32, #tpu.memory_space<vmem>>, %arg6: memref<128x1xf32, #tpu.memory_space<vmem>>, %arg7: memref<1x1xf32, #tpu.memory_space<smem>>, %arg8: memref<1x128xf32, #tpu.memory_space<vmem>>) attributes {dimension_semantics = [#tpu.dimension_semantics<parallel>], iteration_bounds = array<i64: 1>, scalar_prefetch = 0 : i64, scratch_operands = 0 : i64, tpu.core_type = #tpu.core_type<tc>, window_params = [{transform_indices = @transform_0, window_bounds = array<i64: 4, 128>}, {pipeline_mode = #tpu.pipeline_mode<synchronous>, transform_indices = @transform_1, window_bounds = array<i64: 128, 4>}, {pipeline_mode = #tpu.pipeline_mode<synchronous>, transform_indices = @transform_2, window_bounds = array<i64: 128, 1>}, {pipeline_mode = #tpu.pipeline_mode<synchronous>, transform_indices = @transform_3, window_bounds = array<i64: 128, 128>}, {pipeline_mode = #tpu.pipeline_mode<synchronous>, transform_indices = @transform_4, window_bounds = array<i64: 128, 1>}, {pipeline_mode = #tpu.pipeline_mode<synchronous>, transform_indices = @transform_5, window_bounds = array<i64: 128, 1>}, {transform_indices = @transform_6, window_bounds = array<i64: 1, 1>}, {transform_indices = @transform_7, window_bounds = array<i64: 1, 128>}]} {
    %c0 = arith.constant 0 : index
    %c0_0 = arith.constant 0 : index
    %0 = vector.load %arg1[%c0, %c0_0] : memref<4x128xf32, #tpu.memory_space<vmem>>, vector<4x128xf32>
    %c0_1 = arith.constant 0 : index
    %c0_2 = arith.constant 0 : index
    %1 = vector.load %arg2[%c0_1, %c0_2] : memref<128x4xf32, #tpu.memory_space<vmem>>, vector<128x4xf32>
    %cst = arith.constant dense<0.000000e+00> : vector<128x128xf32>
    %2 = tpu.matmul %1, %0, %cst {dimension_numbers = #tpu.dot_dimension_numbers<[1], [0], [0], [1], [0, 0, 1, 1], [], []>} : vector<128x4xf32>, vector<4x128xf32>, vector<128x128xf32> -> vector<128x128xf32>
    %c0_3 = arith.constant 0 : index
    %c0_4 = arith.constant 0 : index
    %3 = vector.load %arg3[%c0_3, %c0_4] : memref<128x1xf32, #tpu.memory_space<vmem>>, vector<128x1xf32>
    %4 = vector.broadcast %3 : vector<128x1xf32> to vector<128x128xf32>
    %5 = arith.addf %2, %4 : vector<128x128xf32>
    %cst_5 = arith.constant 0.000000e+00 : f32
    %6 = vector.broadcast %cst_5 : f32 to vector<128x128xf32>
    %7 = arith.maximumf %5, %6 : vector<128x128xf32>
    %c0_6 = arith.constant 0 : index
    %c0_7 = arith.constant 0 : index
    %8 = vector.load %arg4[%c0_6, %c0_7] : memref<128x128xf32, #tpu.memory_space<vmem>>, vector<128x128xf32>
    %cst_8 = arith.constant dense<0.000000e+00> : vector<128x128xf32>
    %9 = tpu.matmul %8, %7, %cst_8 {dimension_numbers = #tpu.dot_dimension_numbers<[1], [0], [0], [1], [0, 0, 1, 1], [], []>} : vector<128x128xf32>, vector<128x128xf32>, vector<128x128xf32> -> vector<128x128xf32>
    %c0_9 = arith.constant 0 : index
    %c0_10 = arith.constant 0 : index
    %10 = vector.load %arg5[%c0_9, %c0_10] : memref<128x1xf32, #tpu.memory_space<vmem>>, vector<128x1xf32>
    %11 = vector.broadcast %10 : vector<128x1xf32> to vector<128x128xf32>
    %12 = arith.addf %9, %11 : vector<128x128xf32>
    %cst_11 = arith.constant 0.000000e+00 : f32
    %13 = vector.broadcast %cst_11 : f32 to vector<128x128xf32>
    %14 = arith.maximumf %12, %13 : vector<128x128xf32>
    %c0_12 = arith.constant 0 : index
    %c0_13 = arith.constant 0 : index
    %15 = vector.load %arg6[%c0_12, %c0_13] : memref<128x1xf32, #tpu.memory_space<vmem>>, vector<128x1xf32>
    %16 = vector.broadcast %15 : vector<128x1xf32> to vector<128x128xf32>
    %17 = arith.mulf %16, %14 : vector<128x128xf32>
    %cst_14 = arith.constant dense<0.000000e+00> : vector<128xf32>
    %18 = vector.multi_reduction <add>, %17, %cst_14 [0] : vector<128x128xf32> to vector<128xf32>
    %19 = vector.shape_cast %18 : vector<128xf32> to vector<1x128xf32>
    %c0_15 = arith.constant 0 : index
    %c0_16 = arith.constant 0 : index
    %20 = memref.load %arg7[%c0_15, %c0_16] : memref<1x1xf32, #tpu.memory_space<smem>>
    %21 = vector.broadcast %20 : f32 to vector<1x128xf32>
    %22 = arith.addf %19, %21 : vector<1x128xf32>
    %c0_17 = arith.constant 0 : index
    %c0_18 = arith.constant 0 : index
    %23 = vector.load %arg8[%c0_17, %c0_18] : memref<1x128xf32, #tpu.memory_space<vmem>>, vector<1x128xf32>
    tpu.vector_store %arg8[%c0_17, %c0_18], %22 {strides = array<i32>} : memref<1x128xf32, #tpu.memory_space<vmem>>, vector<1x128xf32>,
    return
  }
  func.func @transform_0(%arg0: i32) -> (i32, i32) {
    %c0_i32 = arith.constant 0 : i32
    %c0_i32_0 = arith.constant 0 : i32
    return %c0_i32, %arg0 : i32, i32
  }
  func.func @transform_1(%arg0: i32) -> (i32, i32) {
    %c0_i32 = arith.constant 0 : i32
    %c0_i32_0 = arith.constant 0 : i32
    %c0_i32_1 = arith.constant 0 : i32
    return %c0_i32, %c0_i32_0 : i32, i32
  }
  func.func @transform_2(%arg0: i32) -> (i32, i32) {
    %c0_i32 = arith.constant 0 : i32
    %c0_i32_0 = arith.constant 0 : i32
    %c0_i32_1 = arith.constant 0 : i32
    return %c0_i32, %c0_i32_0 : i32, i32
  }
  func.func @transform_3(%arg0: i32) -> (i32, i32) {
    %c0_i32 = arith.constant 0 : i32
    %c0_i32_0 = arith.constant 0 : i32
    %c0_i32_1 = arith.constant 0 : i32
    return %c0_i32, %c0_i32_0 : i32, i32
  }
  func.func @transform_4(%arg0: i32) -> (i32, i32) {
    %c0_i32 = arith.constant 0 : i32
    %c0_i32_0 = arith.constant 0 : i32
    %c0_i32_1 = arith.constant 0 : i32
    return %c0_i32, %c0_i32_0 : i32, i32
  }
  func.func @transform_5(%arg0: i32) -> (i32, i32) {
    %c0_i32 = arith.constant 0 : i32
    %c0_i32_0 = arith.constant 0 : i32
    %c0_i32_1 = arith.constant 0 : i32
    return %c0_i32, %c0_i32_0 : i32, i32
  }
  func.func @transform_6(%arg0: i32) -> (i32, i32) {
    %c0_i32 = arith.constant 0 : i32
    %c0_i32_0 = arith.constant 0 : i32
    %c0_i32_1 = arith.constant 0 : i32
    return %c0_i32, %c0_i32_0 : i32, i32
  }
  func.func @transform_7(%arg0: i32) -> (i32, i32) {
    %c0_i32 = arith.constant 0 : i32
    %c0_i32_0 = arith.constant 0 : i32
    return %c0_i32, %arg0 : i32, i32
  }
}

</mosaic_0001>

<llo_original>
// kernel: v_network_forward.1
$region0: #{v_network_forward.1}
  #allocation0 [shape = 'u32[]', space=smem, size = 0x4, offset = 0x4, fixed_abs, tag = 'smem constant byte address 0x4 - core index']
  #allocation1 [shape = 'u32[144,128]{1,0:T(1,128)}', space=vmem, size = 0x12000, scoped, tag = 'internal scratch']
  #allocation2 [shape = 'f32[1,1]{1,0:T(1,128)S(6)}', space=smem, size = 0x200, scoped, tag = 'scoped memory for v_network_forward.1']
  %s0 = inlined_call_operand.vmem [shape: f32[4,128], index: 0, kind: input, shape index: {}]
  %s1 = inlined_call_operand.vmem [shape: f32[128,4], index: 1, kind: input, shape index: {}]
  %s2 = inlined_call_operand.vmem [shape: f32[128,1], index: 2, kind: input, shape index: {}]
  %s3 = inlined_call_operand.vmem [shape: f32[128,128], index: 3, kind: input, shape index: {}]
  %s4 = inlined_call_operand.vmem [shape: f32[128,1], index: 4, kind: input, shape index: {}]
  %s5 = inlined_call_operand.vmem [shape: f32[128,1], index: 5, kind: input, shape index: {}]
  %s6 = inlined_call_operand.<no memory space> [shape: f32[1,1], index: 6, kind: input, shape index: {}]
  %s7 = inlined_call_operand.vmem [shape: f32[1,128], index: 7, kind: output, shape index: {}]
  %s8 = sld [smem:[#allocation0]]
  $region38: #{v_network_forward.1} parent=0
    _
  %s10 = ssub.s32 1, %s8
  %s11 = scalar_select 0, %s10, %s8
  %12 = sst [smem:[#allocation2]] %s6
  // Predicated region
  $region2: #{v_network_forward.1} parent=0 // pred_check
    _
  $region3: #{v_network_forward.1} parent=0 // pred_check_branch
    %14 = sbr.rel (0) target = $region5
  $region4: #{v_network_forward.1} parent=0 // pred_region
    _
  $region5: #{v_network_forward.1} parent=0 // pred_fallthru
    _
  // Predicated region
  $region6: #{v_network_forward.1} parent=0 // pred_check
    _
  $region7: #{v_network_forward.1} parent=0 // pred_check_branch
    %16 = sbr.rel (0) target = $region9
  $region8: #{v_network_forward.1} parent=0 // pred_region
    _
  $region9: #{v_network_forward.1} parent=0 // pred_fallthru
    _
  // Predicated region
  $region10: #{v_network_forward.1} parent=0 // pred_check
    _
  $region11: #{v_network_forward.1} parent=0 // pred_check_branch
    %18 = sbr.rel (0) target = $region13
  $region12: #{v_network_forward.1} parent=0 // pred_region
    _
  $region13: #{v_network_forward.1} parent=0 // pred_fallthru
    _
  // Predicated region
  $region14: #{v_network_forward.1} parent=0 // pred_check
    _
  $region15: #{v_network_forward.1} parent=0 // pred_check_branch
    %20 = sbr.rel (0) target = $region17
  $region16: #{v_network_forward.1} parent=0 // pred_region
    _
  $region17: #{v_network_forward.1} parent=0 // pred_fallthru
    _
  // Predicated region
  $region18: #{v_network_forward.1} parent=0 // pred_check
    _
  $region19: #{v_network_forward.1} parent=0 // pred_check_branch
    %22 = sbr.rel (0) target = $region21
  $region20: #{v_network_forward.1} parent=0 // pred_region
    _
  $region21: #{v_network_forward.1} parent=0 // pred_fallthru
    _
  // Predicated region
  $region22: #{v_network_forward.1} parent=0 // pred_check
    _
  $region23: #{v_network_forward.1} parent=0 // pred_check_branch
    %24 = sbr.rel (0) target = $region25
  $region24: #{v_network_forward.1} parent=0 // pred_region
    _
  $region25: #{v_network_forward.1} parent=0 // pred_fallthru
    _
  // Predicated region
  $region26: #{v_network_forward.1} parent=0 // pred_check
    _
  $region27: #{v_network_forward.1} parent=0 // pred_check_branch
    %26 = sbr.rel (0) target = $region29
  $region28: #{v_network_forward.1} parent=0 // pred_region
    _
  $region29: #{v_network_forward.1} parent=0 // pred_fallthru
    _
  %v27 = vld [vmem:[%s0] sm:$0xf]
  %v28 = vld [vmem:[%s1] sm:$0xff]
  %v29 = vld [vmem:[%s1 + $0x8] sm:$0xff]
  %v30 = vld [vmem:[%s1 + $0x10] sm:$0xff]
  %v31 = vld [vmem:[%s1 + $0x18] sm:$0xff]
  %v32 = vld [vmem:[%s1 + $0x20] sm:$0xff]
  %v33 = vld [vmem:[%s1 + $0x28] sm:$0xff]
  %v34 = vld [vmem:[%s1 + $0x30] sm:$0xff]
  %v35 = vld [vmem:[%s1 + $0x38] sm:$0xff]
  %v36 = vld [vmem:[%s1 + $0x40] sm:$0xff]
  %v37 = vld [vmem:[%s1 + $0x48] sm:$0xff]
  %v38 = vld [vmem:[%s1 + $0x50] sm:$0xff]
  %v39 = vld [vmem:[%s1 + $0x58] sm:$0xff]
  %v40 = vld [vmem:[%s1 + $0x60] sm:$0xff]
  %v41 = vld [vmem:[%s1 + $0x68] sm:$0xff]
  %v42 = vld [vmem:[%s1 + $0x70] sm:$0xff]
  %v43 = vld [vmem:[%s1 + $0x78] sm:$0xff]
  %v44 = vld [vmem:[%s2] sm:$0xff]
  %v45 = vld [vmem:[%s2 + $0x8] sm:$0xff]
  %v46 = vld [vmem:[%s2 + $0x10] sm:$0xff]
  %v47 = vld [vmem:[%s2 + $0x18] sm:$0xff]
  %v48 = vld [vmem:[%s2 + $0x20] sm:$0xff]
  %v49 = vld [vmem:[%s2 + $0x28] sm:$0xff]
  %v50 = vld [vmem:[%s2 + $0x30] sm:$0xff]
  %v51 = vld [vmem:[%s2 + $0x38] sm:$0xff]
  %v52 = vld [vmem:[%s2 + $0x40] sm:$0xff]
  %v53 = vld [vmem:[%s2 + $0x48] sm:$0xff]
  %v54 = vld [vmem:[%s2 + $0x50] sm:$0xff]
  %v55 = vld [vmem:[%s2 + $0x58] sm:$0xff]
  %v56 = vld [vmem:[%s2 + $0x60] sm:$0xff]
  %v57 = vld [vmem:[%s2 + $0x68] sm:$0xff]
  %v58 = vld [vmem:[%s2 + $0x70] sm:$0xff]
  %v59 = vld [vmem:[%s2 + $0x78] sm:$0xff]
  %61 = vset.pattern.permute.xlu0 0
  %62 = vperm.xlu0 %61, %v44
  %v63 = vpop.permute.xlu0 %62
  %66 = vset.pattern.permute.xlu0 0
  %67 = vperm.xlu0 %66, %v45
  %v68 = vpop.permute.xlu0 %67
  %71 = vset.pattern.permute.xlu0 0
  %72 = vperm.xlu0 %71, %v46
  %v73 = vpop.permute.xlu0 %72
  %76 = vset.pattern.permute.xlu0 0
  %77 = vperm.xlu0 %76, %v47
  %v78 = vpop.permute.xlu0 %77
  %81 = vset.pattern.permute.xlu0 0
  %82 = vperm.xlu0 %81, %v48
  %v83 = vpop.permute.xlu0 %82
  %86 = vset.pattern.permute.xlu0 0
  %87 = vperm.xlu0 %86, %v49
  %v88 = vpop.permute.xlu0 %87
  %91 = vset.pattern.permute.xlu0 0
  %92 = vperm.xlu0 %91, %v50
  %v93 = vpop.permute.xlu0 %92
  %96 = vset.pattern.permute.xlu0 0
  %97 = vperm.xlu0 %96, %v51
  %v98 = vpop.permute.xlu0 %97
  %101 = vset.pattern.permute.xlu0 0
  %102 = vperm.xlu0 %101, %v52
  %v103 = vpop.permute.xlu0 %102
  %106 = vset.pattern.permute.xlu0 0
  %107 = vperm.xlu0 %106, %v53
  %v108 = vpop.permute.xlu0 %107
  %111 = vset.pattern.permute.xlu0 0
  %112 = vperm.xlu0 %111, %v54
  %v113 = vpop.permute.xlu0 %112
  %116 = vset.pattern.permute.xlu0 0
  %117 = vperm.xlu0 %116, %v55
  %v118 = vpop.permute.xlu0 %117
  %121 = vset.pattern.permute.xlu0 0
  %122 = vperm.xlu0 %121, %v56
  %v123 = vpop.permute.xlu0 %122
  %126 = vset.pattern.permute.xlu0 0
  %127 = vperm.xlu0 %126, %v57
  %v128 = vpop.permute.xlu0 %127
  %131 = vset.pattern.permute.xlu0 0
  %132 = vperm.xlu0 %131, %v58
  %v133 = vpop.permute.xlu0 %132
  %136 = vset.pattern.permute.xlu0 0
  %137 = vperm.xlu0 %136, %v59
  %v138 = vpop.permute.xlu0 %137
  %vm140 = vcmask 31744
  %v142 = vsel %vm140, %v28, 0
  %v145 = vsel %vm140, %v29, 0
  %v148 = vsel %vm140, %v30, 0
  %v151 = vsel %vm140, %v31, 0
  %v154 = vsel %vm140, %v32, 0
  %v157 = vsel %vm140, %v33, 0
  %v160 = vsel %vm140, %v34, 0
  %v163 = vsel %vm140, %v35, 0
  %v166 = vsel %vm140, %v36, 0
  %v169 = vsel %vm140, %v37, 0
  %v172 = vsel %vm140, %v38, 0
  %v175 = vsel %vm140, %v39, 0
  %v178 = vsel %vm140, %v40, 0
  %v181 = vsel %vm140, %v41, 0
  %v184 = vsel %vm140, %v42, 0
  %v187 = vsel %vm140, %v43, 0
  %vm189 = vcmask 1043456
  %v191 = vsel %vm189, %v27, 0
  %193 = vmatprep.subr.mxu0 0.0
  %194 = vmatpush1.msra.mxu0 0.0
  %195 = vmatprep.subr.mxu0 0.0
  %196 = vmatpush1.msra.mxu0 0.0
  %197 = vmatprep.subr.mxu0 0.0
  %198 = vmatpush1.msra.mxu0 0.0
  %199 = vmatprep.subr.mxu0 0.0
  %200 = vmatpush1.msra.mxu0 0.0
  %201 = vmatprep.subr.mxu0 0.0
  %202 = vmatpush1.msra.mxu0 0.0
  %203 = vmatprep.subr.mxu0 0.0
  %204 = vmatpush1.msra.mxu0 0.0
  %205 = vmatprep.subr.mxu0 0.0
  %206 = vmatpush1.msra.mxu0 0.0
  %207 = vmatprep.subr.mxu0 0.0
  %208 = vmatpush1.msra.mxu0 0.0
  %209 = vmatprep.subr.mxu0 0.0
  %210 = vmatpush1.msra.mxu0 0.0
  %211 = vmatprep.subr.mxu0 0.0
  %212 = vmatpush1.msra.mxu0 0.0
  %213 = vmatprep.subr.mxu0 0.0
  %214 = vmatpush1.msra.mxu0 0.0
  %215 = vmatprep.subr.mxu0 0.0
  %216 = vmatpush1.msra.mxu0 0.0
  %217 = vmatprep.subr.mxu0 0.0
  %218 = vmatpush1.msra.mxu0 0.0
  %219 = vmatprep.subr.mxu0 0.0
  %220 = vmatpush1.msra.mxu0 0.0
  %221 = vmatprep.subr.mxu0 0.0
  %222 = vmatpush1.msra.mxu0 0.0
  %223 = vmatprep.subr.mxu0 0.0
  %224 = vmatpush1.msra.mxu0 %v191
  %225 = vmatprep.subr.mxu0 0.0
  %226 = vmatpush2.msra.mxu0 0.0
  %227 = vmatprep.subr.mxu0 0.0
  %228 = vmatpush2.msra.mxu0 0.0
  %229 = vmatprep.subr.mxu0 0.0
  %230 = vmatpush2.msra.mxu0 0.0
  %231 = vmatprep.subr.mxu0 0.0
  %232 = vmatpush2.msra.mxu0 0.0
  %233 = vmatprep.subr.mxu0 0.0
  %234 = vmatpush2.msra.mxu0 0.0
  %235 = vmatprep.subr.mxu0 0.0
  %236 = vmatpush2.msra.mxu0 0.0
  %237 = vmatprep.subr.mxu0 0.0
  %238 = vmatpush2.msra.mxu0 0.0
  %239 = vmatprep.subr.mxu0 0.0
  %240 = vmatpush2.msra.mxu0 0.0
  %241 = vmatprep.subr.mxu0 0.0
  %242 = vmatpush2.msra.mxu0 0.0
  %243 = vmatprep.subr.mxu0 0.0
  %244 = vmatpush2.msra.mxu0 0.0
  %245 = vmatprep.subr.mxu0 0.0
  %246 = vmatpush2.msra.mxu0 0.0
  %247 = vmatprep.subr.mxu0 0.0
  %248 = vmatpush2.msra.mxu0 0.0
  %249 = vmatprep.subr.mxu0 0.0
  %250 = vmatpush2.msra.mxu0 0.0
  %251 = vmatprep.subr.mxu0 0.0
  %252 = vmatpush2.msra.mxu0 0.0
  %253 = vmatprep.subr.mxu0 0.0
  %254 = vmatpush2.msra.mxu0 0.0
  %255 = vmatprep.subr.mxu0 0.0
  %256 = vmatpush2.msra.mxu0 0.0
  %257 = vmatprep.mubr.f32.mxu0 0.0
  %258 = vmatmul.mubr.f32.gmra.mxu0 %v142
  %v259 = vpop.f32.mrf.mxu0
  %v260 = vadd.f32 %v63, %v259
  %v261 = vpop.f32.mrf.mxu0
  %262 = vmatprep.mubr.f32.mxu0 0.0
  %263 = vmatmul.mubr.f32.gmra.mxu0 %v145
  %v264 = vpop.f32.mrf.mxu0
  %v265 = vadd.f32 %v68, %v264
  %v266 = vpop.f32.mrf.mxu0
  %267 = vmatprep.mubr.f32.mxu0 0.0
  %268 = vmatmul.mubr.f32.gmra.mxu0 %v148
  %v269 = vpop.f32.mrf.mxu0
  %v270 = vadd.f32 %v73, %v269
  %v271 = vpop.f32.mrf.mxu0
  %272 = vmatprep.mubr.f32.mxu0 0.0
  %273 = vmatmul.mubr.f32.gmra.mxu0 %v151
  %v274 = vpop.f32.mrf.mxu0
  %v275 = vadd.f32 %v78, %v274
  %v276 = vpop.f32.mrf.mxu0
  %277 = vmatprep.mubr.f32.mxu0 0.0
  %278 = vmatmul.mubr.f32.gmra.mxu0 %v154
  %v279 = vpop.f32.mrf.mxu0
  %v280 = vadd.f32 %v83, %v279
  %v281 = vpop.f32.mrf.mxu0
  %282 = vmatprep.mubr.f32.mxu0 0.0
  %283 = vmatmul.mubr.f32.gmra.mxu0 %v157
  %v284 = vpop.f32.mrf.mxu0
  %v285 = vadd.f32 %v88, %v284
  %v286 = vpop.f32.mrf.mxu0
  %287 = vmatprep.mubr.f32.mxu0 0.0
  %288 = vmatmul.mubr.f32.gmra.mxu0 %v160
  %v289 = vpop.f32.mrf.mxu0
  %v290 = vadd.f32 %v93, %v289
  %v291 = vpop.f32.mrf.mxu0
  %292 = vmatprep.mubr.f32.mxu0 0.0
  %293 = vmatmul.mubr.f32.gmra.mxu0 %v163
  %v294 = vpop.f32.mrf.mxu0
  %v295 = vadd.f32 %v98, %v294
  %v296 = vpop.f32.mrf.mxu0
  %297 = vmatprep.mubr.f32.mxu0 0.0
  %298 = vmatmul.mubr.f32.gmra.mxu0 %v166
  %v299 = vpop.f32.mrf.mxu0
  %v300 = vadd.f32 %v103, %v299
  %v301 = vpop.f32.mrf.mxu0
  %302 = vmatprep.mubr.f32.mxu0 0.0
  %303 = vmatmul.mubr.f32.gmra.mxu0 %v169
  %v304 = vpop.f32.mrf.mxu0
  %v305 = vadd.f32 %v108, %v304
  %v306 = vpop.f32.mrf.mxu0
  %307 = vmatprep.mubr.f32.mxu0 0.0
  %308 = vmatmul.mubr.f32.gmra.mxu0 %v172
  %v309 = vpop.f32.mrf.mxu0
  %v310 = vadd.f32 %v113, %v309
  %v311 = vpop.f32.mrf.mxu0
  %312 = vmatprep.mubr.f32.mxu0 0.0
  %313 = vmatmul.mubr.f32.gmra.mxu0 %v175
  %v314 = vpop.f32.mrf.mxu0
  %v315 = vadd.f32 %v118, %v314
  %v316 = vpop.f32.mrf.mxu0
  %317 = vmatprep.mubr.f32.mxu0 0.0
  %318 = vmatmul.mubr.f32.gmra.mxu0 %v178
  %v319 = vpop.f32.mrf.mxu0
  %v320 = vadd.f32 %v123, %v319
  %v321 = vpop.f32.mrf.mxu0
  %322 = vmatprep.mubr.f32.mxu0 0.0
  %323 = vmatmul.mubr.f32.gmra.mxu0 %v181
  %v324 = vpop.f32.mrf.mxu0
  %v325 = vadd.f32 %v128, %v324
  %v326 = vpop.f32.mrf.mxu0
  %327 = vmatprep.mubr.f32.mxu0 0.0
  %328 = vmatmul.mubr.f32.gmra.mxu0 %v184
  %v329 = vpop.f32.mrf.mxu0
  %v330 = vadd.f32 %v133, %v329
  %v331 = vpop.f32.mrf.mxu0
  %332 = vmatprep.mubr.f32.mxu0 0.0
  %333 = vmatmul.mubr.f32.gmra.mxu0 %v187
  %v334 = vpop.f32.mrf.mxu0
  %v335 = vadd.f32 %v138, %v334
  %v336 = vpop.f32.mrf.mxu0
  %337 = vdwg.mxu0
  %v338 = vmax.f32 %v260, 0.0
  %v339 = vmax.f32 %v265, 0.0
  %v340 = vmax.f32 %v270, 0.0
  %v341 = vmax.f32 %v275, 0.0
  %v342 = vmax.f32 %v280, 0.0
  %v343 = vmax.f32 %v285, 0.0
  %v344 = vmax.f32 %v290, 0.0
  %v345 = vmax.f32 %v295, 0.0
  %v346 = vmax.f32 %v300, 0.0
  %v347 = vmax.f32 %v305, 0.0
  %v348 = vmax.f32 %v310, 0.0
  %v349 = vmax.f32 %v315, 0.0
  %v350 = vmax.f32 %v320, 0.0
  %v351 = vmax.f32 %v325, 0.0
  %v352 = vmax.f32 %v330, 0.0
  %v353 = vmax.f32 %v335, 0.0
  %v354 = vld [vmem:[%s3] sm:$0xff]
  %v355 = vld [vmem:[%s3 + $0x8] sm:$0xff]
  %v356 = vld [vmem:[%s3 + $0x10] sm:$0xff]
  %v357 = vld [vmem:[%s3 + $0x18] sm:$0xff]
  %v358 = vld [vmem:[%s3 + $0x20] sm:$0xff]
  %v359 = vld [vmem:[%s3 + $0x28] sm:$0xff]
  %v360 = vld [vmem:[%s3 + $0x30] sm:$0xff]
  %v361 = vld [vmem:[%s3 + $0x38] sm:$0xff]
  %v362 = vld [vmem:[%s3 + $0x40] sm:$0xff]
  %v363 = vld [vmem:[%s3 + $0x48] sm:$0xff]
  %v364 = vld [vmem:[%s3 + $0x50] sm:$0xff]
  %v365 = vld [vmem:[%s3 + $0x58] sm:$0xff]
  %v366 = vld [vmem:[%s3 + $0x60] sm:$0xff]
  %v367 = vld [vmem:[%s3 + $0x68] sm:$0xff]
  %v368 = vld [vmem:[%s3 + $0x70] sm:$0xff]
  %v369 = vld [vmem:[%s3 + $0x78] sm:$0xff]
  %v370 = vld [vmem:[%s4] sm:$0xff]
  %v371 = vld [vmem:[%s4 + $0x8] sm:$0xff]
  %v372 = vld [vmem:[%s4 + $0x10] sm:$0xff]
  %v373 = vld [vmem:[%s4 + $0x18] sm:$0xff]
  %v374 = vld [vmem:[%s4 + $0x20] sm:$0xff]
  %v375 = vld [vmem:[%s4 + $0x28] sm:$0xff]
  %v376 = vld [vmem:[%s4 + $0x30] sm:$0xff]
  %v377 = vld [vmem:[%s4 + $0x38] sm:$0xff]
  %v378 = vld [vmem:[%s4 + $0x40] sm:$0xff]
  %v379 = vld [vmem:[%s4 + $0x48] sm:$0xff]
  %v380 = vld [vmem:[%s4 + $0x50] sm:$0xff]
  %v381 = vld [vmem:[%s4 + $0x58] sm:$0xff]
  %v382 = vld [vmem:[%s4 + $0x60] sm:$0xff]
  %v383 = vld [vmem:[%s4 + $0x68] sm:$0xff]
  %v384 = vld [vmem:[%s4 + $0x70] sm:$0xff]
  %v385 = vld [vmem:[%s4 + $0x78] sm:$0xff]
  %387 = vset.pattern.permute.xlu0 0
  %388 = vperm.xlu0 %387, %v370
  %v389 = vpop.permute.xlu0 %388
  %392 = vset.pattern.permute.xlu0 0
  %393 = vperm.xlu0 %392, %v371
  %v394 = vpop.permute.xlu0 %393
  %397 = vset.pattern.permute.xlu0 0
  %398 = vperm.xlu0 %397, %v372
  %v399 = vpop.permute.xlu0 %398
  %402 = vset.pattern.permute.xlu0 0
  %403 = vperm.xlu0 %402, %v373
  %v404 = vpop.permute.xlu0 %403
  %407 = vset.pattern.permute.xlu0 0
  %408 = vperm.xlu0 %407, %v374
  %v409 = vpop.permute.xlu0 %408
  %412 = vset.pattern.permute.xlu0 0
  %413 = vperm.xlu0 %412, %v375
  %v414 = vpop.permute.xlu0 %413
  %417 = vset.pattern.permute.xlu0 0
  %418 = vperm.xlu0 %417, %v376
  %v419 = vpop.permute.xlu0 %418
  %422 = vset.pattern.permute.xlu0 0
  %423 = vperm.xlu0 %422, %v377
  %v424 = vpop.permute.xlu0 %423
  %427 = vset.pattern.permute.xlu0 0
  %428 = vperm.xlu0 %427, %v378
  %v429 = vpop.permute.xlu0 %428
  %432 = vset.pattern.permute.xlu0 0
  %433 = vperm.xlu0 %432, %v379
  %v434 = vpop.permute.xlu0 %433
  %437 = vset.pattern.permute.xlu0 0
  %438 = vperm.xlu0 %437, %v380
  %v439 = vpop.permute.xlu0 %438
  %442 = vset.pattern.permute.xlu0 0
  %443 = vperm.xlu0 %442, %v381
  %v444 = vpop.permute.xlu0 %443
  %447 = vset.pattern.permute.xlu0 0
  %448 = vperm.xlu0 %447, %v382
  %v449 = vpop.permute.xlu0 %448
  %452 = vset.pattern.permute.xlu0 0
  %453 = vperm.xlu0 %452, %v383
  %v454 = vpop.permute.xlu0 %453
  %457 = vset.pattern.permute.xlu0 0
  %458 = vperm.xlu0 %457, %v384
  %v459 = vpop.permute.xlu0 %458
  %462 = vset.pattern.permute.xlu0 0
  %463 = vperm.xlu0 %462, %v385
  %v464 = vpop.permute.xlu0 %463
  %466 = vmatprep.subr.mxu0 0.0
  %467 = vmatpush1.msra.mxu0 %v353
  %468 = vmatprep.subr.mxu0 0.0
  %469 = vmatpush1.msra.mxu0 %v352
  %470 = vmatprep.subr.mxu0 0.0
  %471 = vmatpush1.msra.mxu0 %v351
  %472 = vmatprep.subr.mxu0 0.0
  %473 = vmatpush1.msra.mxu0 %v350
  %474 = vmatprep.subr.mxu0 0.0
  %475 = vmatpush1.msra.mxu0 %v349
  %476 = vmatprep.subr.mxu0 0.0
  %477 = vmatpush1.msra.mxu0 %v348
  %478 = vmatprep.subr.mxu0 0.0
  %479 = vmatpush1.msra.mxu0 %v347
  %480 = vmatprep.subr.mxu0 0.0
  %481 = vmatpush1.msra.mxu0 %v346
  %482 = vmatprep.subr.mxu0 0.0
  %483 = vmatpush1.msra.mxu0 %v345
  %484 = vmatprep.subr.mxu0 0.0
  %485 = vmatpush1.msra.mxu0 %v344
  %486 = vmatprep.subr.mxu0 0.0
  %487 = vmatpush1.msra.mxu0 %v343
  %488 = vmatprep.subr.mxu0 0.0
  %489 = vmatpush1.msra.mxu0 %v342
  %490 = vmatprep.subr.mxu0 0.0
  %491 = vmatpush1.msra.mxu0 %v341
  %492 = vmatprep.subr.mxu0 0.0
  %493 = vmatpush1.msra.mxu0 %v340
  %494 = vmatprep.subr.mxu0 0.0
  %495 = vmatpush1.msra.mxu0 %v339
  %496 = vmatprep.subr.mxu0 0.0
  %497 = vmatpush1.msra.mxu0 %v338
  %498 = vmatprep.subr.mxu0 0.0
  %499 = vmatpush2.msra.mxu0 0.0
  %500 = vmatprep.subr.mxu0 0.0
  %501 = vmatpush2.msra.mxu0 0.0
  %502 = vmatprep.subr.mxu0 0.0
  %503 = vmatpush2.msra.mxu0 0.0
  %504 = vmatprep.subr.mxu0 0.0
  %505 = vmatpush2.msra.mxu0 0.0
  %506 = vmatprep.subr.mxu0 0.0
  %507 = vmatpush2.msra.mxu0 0.0
  %508 = vmatprep.subr.mxu0 0.0
  %509 = vmatpush2.msra.mxu0 0.0
  %510 = vmatprep.subr.mxu0 0.0
  %511 = vmatpush2.msra.mxu0 0.0
  %512 = vmatprep.subr.mxu0 0.0
  %513 = vmatpush2.msra.mxu0 0.0
  %514 = vmatprep.subr.mxu0 0.0
  %515 = vmatpush2.msra.mxu0 0.0
  %516 = vmatprep.subr.mxu0 0.0
  %517 = vmatpush2.msra.mxu0 0.0
  %518 = vmatprep.subr.mxu0 0.0
  %519 = vmatpush2.msra.mxu0 0.0
  %520 = vmatprep.subr.mxu0 0.0
  %521 = vmatpush2.msra.mxu0 0.0
  %522 = vmatprep.subr.mxu0 0.0
  %523 = vmatpush2.msra.mxu0 0.0
  %524 = vmatprep.subr.mxu0 0.0
  %525 = vmatpush2.msra.mxu0 0.0
  %526 = vmatprep.subr.mxu0 0.0
  %527 = vmatpush2.msra.mxu0 0.0
  %528 = vmatprep.subr.mxu0 0.0
  %529 = vmatpush2.msra.mxu0 0.0
  %530 = vmatprep.mubr.f32.mxu0 0.0
  %531 = vmatmul.mubr.f32.gmra.mxu0 %v354
  %v532 = vpop.f32.mrf.mxu0
  %v533 = vadd.f32 %v389, %v532
  %v534 = vpop.f32.mrf.mxu0
  %535 = vmatprep.mubr.f32.mxu0 0.0
  %536 = vmatmul.mubr.f32.gmra.mxu0 %v355
  %v537 = vpop.f32.mrf.mxu0
  %v538 = vadd.f32 %v394, %v537
  %v539 = vpop.f32.mrf.mxu0
  %540 = vmatprep.mubr.f32.mxu0 0.0
  %541 = vmatmul.mubr.f32.gmra.mxu0 %v356
  %v542 = vpop.f32.mrf.mxu0
  %v543 = vadd.f32 %v399, %v542
  %v544 = vpop.f32.mrf.mxu0
  %545 = vmatprep.mubr.f32.mxu0 0.0
  %546 = vmatmul.mubr.f32.gmra.mxu0 %v357
  %v547 = vpop.f32.mrf.mxu0
  %v548 = vadd.f32 %v404, %v547
  %v549 = vpop.f32.mrf.mxu0
  %550 = vmatprep.mubr.f32.mxu0 0.0
  %551 = vmatmul.mubr.f32.gmra.mxu0 %v358
  %v552 = vpop.f32.mrf.mxu0
  %v553 = vadd.f32 %v409, %v552
  %v554 = vpop.f32.mrf.mxu0
  %555 = vmatprep.mubr.f32.mxu0 0.0
  %556 = vmatmul.mubr.f32.gmra.mxu0 %v359
  %v557 = vpop.f32.mrf.mxu0
  %v558 = vadd.f32 %v414, %v557
  %v559 = vpop.f32.mrf.mxu0
  %560 = vmatprep.mubr.f32.mxu0 0.0
  %561 = vmatmul.mubr.f32.gmra.mxu0 %v360
  %v562 = vpop.f32.mrf.mxu0
  %v563 = vadd.f32 %v419, %v562
  %v564 = vpop.f32.mrf.mxu0
  %565 = vmatprep.mubr.f32.mxu0 0.0
  %566 = vmatmul.mubr.f32.gmra.mxu0 %v361
  %v567 = vpop.f32.mrf.mxu0
  %v568 = vadd.f32 %v424, %v567
  %v569 = vpop.f32.mrf.mxu0
  %570 = vmatprep.mubr.f32.mxu0 0.0
  %571 = vmatmul.mubr.f32.gmra.mxu0 %v362
  %v572 = vpop.f32.mrf.mxu0
  %v573 = vadd.f32 %v429, %v572
  %v574 = vpop.f32.mrf.mxu0
  %575 = vmatprep.mubr.f32.mxu0 0.0
  %576 = vmatmul.mubr.f32.gmra.mxu0 %v363
  %v577 = vpop.f32.mrf.mxu0
  %v578 = vadd.f32 %v434, %v577
  %v579 = vpop.f32.mrf.mxu0
  %580 = vmatprep.mubr.f32.mxu0 0.0
  %581 = vmatmul.mubr.f32.gmra.mxu0 %v364
  %v582 = vpop.f32.mrf.mxu0
  %v583 = vadd.f32 %v439, %v582
  %v584 = vpop.f32.mrf.mxu0
  %585 = vmatprep.mubr.f32.mxu0 0.0
  %586 = vmatmul.mubr.f32.gmra.mxu0 %v365
  %v587 = vpop.f32.mrf.mxu0
  %v588 = vadd.f32 %v444, %v587
  %v589 = vpop.f32.mrf.mxu0
  %590 = vmatprep.mubr.f32.mxu0 0.0
  %591 = vmatmul.mubr.f32.gmra.mxu0 %v366
  %v592 = vpop.f32.mrf.mxu0
  %v593 = vadd.f32 %v449, %v592
  %v594 = vpop.f32.mrf.mxu0
  %595 = vmatprep.mubr.f32.mxu0 0.0
  %596 = vmatmul.mubr.f32.gmra.mxu0 %v367
  %v597 = vpop.f32.mrf.mxu0
  %v598 = vadd.f32 %v454, %v597
  %v599 = vpop.f32.mrf.mxu0
  %600 = vmatprep.mubr.f32.mxu0 0.0
  %601 = vmatmul.mubr.f32.gmra.mxu0 %v368
  %v602 = vpop.f32.mrf.mxu0
  %v603 = vadd.f32 %v459, %v602
  %v604 = vpop.f32.mrf.mxu0
  %605 = vmatprep.mubr.f32.mxu0 0.0
  %606 = vmatmul.mubr.f32.gmra.mxu0 %v369
  %v607 = vpop.f32.mrf.mxu0
  %v608 = vadd.f32 %v464, %v607
  %v609 = vpop.f32.mrf.mxu0
  %610 = vdwg.mxu0
  %v611 = vmax.f32 %v533, 0.0
  %v612 = vmax.f32 %v538, 0.0
  %v613 = vmax.f32 %v543, 0.0
  %v614 = vmax.f32 %v548, 0.0
  %v615 = vmax.f32 %v553, 0.0
  %v616 = vmax.f32 %v558, 0.0
  %v617 = vmax.f32 %v563, 0.0
  %v618 = vmax.f32 %v568, 0.0
  %v619 = vmax.f32 %v573, 0.0
  %v620 = vmax.f32 %v578, 0.0
  %v621 = vmax.f32 %v583, 0.0
  %v622 = vmax.f32 %v588, 0.0
  %v623 = vmax.f32 %v593, 0.0
  %v624 = vmax.f32 %v598, 0.0
  %v625 = vmax.f32 %v603, 0.0
  %v626 = vmax.f32 %v608, 0.0
  %v627 = vld [vmem:[%s5] sm:$0xff]
  %v628 = vld [vmem:[%s5 + $0x8] sm:$0xff]
  %v629 = vld [vmem:[%s5 + $0x10] sm:$0xff]
  %v630 = vld [vmem:[%s5 + $0x18] sm:$0xff]
  %v631 = vld [vmem:[%s5 + $0x20] sm:$0xff]
  %v632 = vld [vmem:[%s5 + $0x28] sm:$0xff]
  %v633 = vld [vmem:[%s5 + $0x30] sm:$0xff]
  %v634 = vld [vmem:[%s5 + $0x38] sm:$0xff]
  %v635 = vld [vmem:[%s5 + $0x40] sm:$0xff]
  %v636 = vld [vmem:[%s5 + $0x48] sm:$0xff]
  %v637 = vld [vmem:[%s5 + $0x50] sm:$0xff]
  %v638 = vld [vmem:[%s5 + $0x58] sm:$0xff]
  %v639 = vld [vmem:[%s5 + $0x60] sm:$0xff]
  %v640 = vld [vmem:[%s5 + $0x68] sm:$0xff]
  %v641 = vld [vmem:[%s5 + $0x70] sm:$0xff]
  %v642 = vld [vmem:[%s5 + $0x78] sm:$0xff]
  %644 = vset.pattern.permute.xlu0 0
  %645 = vperm.xlu0 %644, %v627
  %v646 = vpop.permute.xlu0 %645
  %649 = vset.pattern.permute.xlu0 0
  %650 = vperm.xlu0 %649, %v628
  %v651 = vpop.permute.xlu0 %650
  %654 = vset.pattern.permute.xlu0 0
  %655 = vperm.xlu0 %654, %v629
  %v656 = vpop.permute.xlu0 %655
  %659 = vset.pattern.permute.xlu0 0
  %660 = vperm.xlu0 %659, %v630
  %v661 = vpop.permute.xlu0 %660
  %664 = vset.pattern.permute.xlu0 0
  %665 = vperm.xlu0 %664, %v631
  %v666 = vpop.permute.xlu0 %665
  %669 = vset.pattern.permute.xlu0 0
  %670 = vperm.xlu0 %669, %v632
  %v671 = vpop.permute.xlu0 %670
  %674 = vset.pattern.permute.xlu0 0
  %675 = vperm.xlu0 %674, %v633
  %v676 = vpop.permute.xlu0 %675
  %679 = vset.pattern.permute.xlu0 0
  %680 = vperm.xlu0 %679, %v634
  %v681 = vpop.permute.xlu0 %680
  %684 = vset.pattern.permute.xlu0 0
  %685 = vperm.xlu0 %684, %v635
  %v686 = vpop.permute.xlu0 %685
  %689 = vset.pattern.permute.xlu0 0
  %690 = vperm.xlu0 %689, %v636
  %v691 = vpop.permute.xlu0 %690
  %694 = vset.pattern.permute.xlu0 0
  %695 = vperm.xlu0 %694, %v637
  %v696 = vpop.permute.xlu0 %695
  %699 = vset.pattern.permute.xlu0 0
  %700 = vperm.xlu0 %699, %v638
  %v701 = vpop.permute.xlu0 %700
  %704 = vset.pattern.permute.xlu0 0
  %705 = vperm.xlu0 %704, %v639
  %v706 = vpop.permute.xlu0 %705
  %709 = vset.pattern.permute.xlu0 0
  %710 = vperm.xlu0 %709, %v640
  %v711 = vpop.permute.xlu0 %710
  %714 = vset.pattern.permute.xlu0 0
  %715 = vperm.xlu0 %714, %v641
  %v716 = vpop.permute.xlu0 %715
  %719 = vset.pattern.permute.xlu0 0
  %720 = vperm.xlu0 %719, %v642
  %v721 = vpop.permute.xlu0 %720
  %v723 = vmul.f32 %v646, %v611
  %v724 = vmul.f32 %v651, %v612
  %v725 = vmul.f32 %v656, %v613
  %v726 = vmul.f32 %v661, %v614
  %v727 = vmul.f32 %v666, %v615
  %v728 = vmul.f32 %v671, %v616
  %v729 = vmul.f32 %v676, %v617
  %v730 = vmul.f32 %v681, %v618
  %v731 = vmul.f32 %v686, %v619
  %v732 = vmul.f32 %v691, %v620
  %v733 = vmul.f32 %v696, %v621
  %v734 = vmul.f32 %v701, %v622
  %v735 = vmul.f32 %v706, %v623
  %v736 = vmul.f32 %v711, %v624
  %v737 = vmul.f32 %v716, %v625
  %v738 = vmul.f32 %v721, %v626
  %v739 = vadd.f32 %v723, %v724
  %v740 = vadd.f32 %v739, %v725
  %v741 = vadd.f32 %v740, %v726
  %v742 = vadd.f32 %v741, %v727
  %v743 = vadd.f32 %v742, %v728
  %v744 = vadd.f32 %v743, %v729
  %v745 = vadd.f32 %v744, %v730
  %v746 = vadd.f32 %v745, %v731
  %v747 = vadd.f32 %v746, %v732
  %v748 = vadd.f32 %v747, %v733
  %v749 = vadd.f32 %v748, %v734
  %v750 = vadd.f32 %v749, %v735
  %v751 = vadd.f32 %v750, %v736
  %v752 = vadd.f32 %v751, %v737
  %v753 = vadd.f32 %v752, %v738
  %v754 = vrot.slane %v753, 4
  %v755 = vadd.f32 %v753, %v754
  %v756 = vrot.slane %v755, 2
  %v757 = vadd.f32 %v755, %v756
  %v758 = vrot.slane %v757, 1
  %v759 = vadd.f32 %v757, %v758
  %s760 = sld [smem:[#allocation2]]
  %v761 = vstv %s760
  %v762 = vadd.f32 %v759, %v761
  %763 = vst [vmem:[%s7] sm:$0x1] %v762
  // Predicated region
  $region30: #{v_network_forward.1} parent=0 // pred_check
    _
  $region31: #{v_network_forward.1} parent=0 // pred_check_branch
    %765 = sbr.rel (0) target = $region33
  $region32: #{v_network_forward.1} parent=0 // pred_region
    _
  $region33: #{v_network_forward.1} parent=0 // pred_fallthru
    _
  // Predicated region
  $region34: #{v_network_forward.1} parent=0 // pred_check
    _
  $region35: #{v_network_forward.1} parent=0 // pred_check_branch
    %767 = sbr.rel (0) target = $region37
  $region36: #{v_network_forward.1} parent=0 // pred_region
    _
  $region37: #{v_network_forward.1} parent=0 // pred_fallthru
    _

</llo_original>
